<compile_context>
chip_gen: v7x
topology: tpu7x:2x2x1
jax: 0.10.0
libtpu: 0.0.40
codegen_flags: <defaults>
</compile_context>

<pallas_src>
import functools

import jax
import jax.numpy as jnp
from jax.experimental import pallas as pl
from jax.experimental.pallas import tpu as pltpu


# --------------------------------------------------------------------------
# Generic tiled linear:  (B, N, K) @ (K, M) + (M,)  ->  (B, N, M) bf16
# --------------------------------------------------------------------------

def _linear_kernel(x_ref, w_ref, b_ref, o_ref, acc_ref):
    # x_ref: (TR, TK) f32 (cast to bf16 in-kernel), w_ref: (TK, M) bf16,
    # b_ref: (1, M) f32, o_ref: (TR, M) bf16, acc_ref: (TR, M) f32 scratch.
    k = pl.program_id(1)

    @pl.when(k == 0)
    def _():
        acc_ref[...] = jnp.zeros_like(acc_ref)

    acc_ref[...] += jnp.dot(x_ref[...].astype(jnp.bfloat16), w_ref[...],
                            preferred_element_type=jnp.float32)

    @pl.when(k == pl.num_programs(1) - 1)
    def _():
        o_ref[...] = (acc_ref[...] + b_ref[...]).astype(o_ref.dtype)


def _pick_linear_tiles(rows, K, M, budget_bytes=6 * 1024 * 1024):
    """Pick (row_tile, k_tile) that satisfy the (8,128) rule and a VMEM byte budget."""
    def legal(n, align, opts):
        out = [t for t in opts if t <= n and n % t == 0 and t % align == 0]
        if n not in out:
            out.append(n)            # full dim is always a legal block size
        return out

    tr_opts = legal(rows, 8, (1024, 512, 256, 128, 64, 32, 16, 8))
    tk_opts = legal(K, 128, (4096, 2048, 1024, 512, 256, 128))

    cands = []
    for tr in tr_opts:
        for tk in tk_opts:
            # double-buffered x/w/out tiles + bias + f32 accumulator scratch
            need = 2 * (tr * tk * 4 + tk * M * 2 + tr * M * 2) + M * 4 + tr * M * 4
            cands.append((need <= budget_bytes, tr * tk, tr, tk, need))
    fits = [c for c in cands if c[0]]
    if fits:
        _, _, tr, tk, _ = max(fits, key=lambda c: (c[1], c[2]))
    else:
        _, _, tr, tk, _ = min(cands, key=lambda c: c[4])
    return tr, tk


def pallas_linear(x, w, b):
    """Batched linear with f32 accumulation; activations cast to bf16 inside the kernel."""
    B, N, K = x.shape
    M = w.shape[1]
    rows = B * N
    tr, tk = _pick_linear_tiles(rows, K, M)
    x2 = x.reshape(rows, K)                      # keep source dtype; cast happens in-kernel
    out = pl.pallas_call(
        _linear_kernel,
        out_shape=jax.ShapeDtypeStruct((rows, M), jnp.bfloat16),
        grid_spec=pltpu.PrefetchScalarGridSpec(
            num_scalar_prefetch=0,
            grid=(rows // tr, K // tk),          # reduction axis last
            in_specs=[
                pl.BlockSpec((tr, tk), lambda r, k: (r, k)),
                pl.BlockSpec((tk, M), lambda r, k: (k, 0)),
                pl.BlockSpec((1, M), lambda r, k: (0, 0)),
            ],
            out_specs=pl.BlockSpec((tr, M), lambda r, k: (r, 0)),
            scratch_shapes=[pltpu.VMEM((tr, M), jnp.float32)],
        ),
        compiler_params=pltpu.CompilerParams(
            dimension_semantics=("parallel", "arbitrary"),
            vmem_limit_bytes=32 * 1024 * 1024),
    )(x2, w.astype(jnp.bfloat16), b.reshape(1, M).astype(jnp.float32))
    return out.reshape(B, N, M)


# --------------------------------------------------------------------------
# Fused BERT encoder stack (one pallas_call; grid over layers only)
# --------------------------------------------------------------------------

def _layernorm(x, g, b, eps=1e-12):
    mu = jnp.mean(x, axis=-1, keepdims=True)
    var = jnp.mean((x - mu) ** 2, axis=-1, keepdims=True)
    return (x - mu) * jax.lax.rsqrt(var + eps) * g + b


def _encoder_stack_kernel(x_ref, mask_ref, watt_ref,
                          wqkv_ref, wo_ref, w1_ref, w2_ref, small_ref, b1_ref,
                          o_ref, sp_ref, h_ref, bias_ref, *, num_heads, vid_len):
    # grid = (num_layers,). The residual stream (B*S, H) f32 lives in h_ref across layers;
    # Pallas prefetches layer l+1's weights behind layer l's compute. All B sequences are
    # processed in every grid step so per-layer weights are DMA'd exactly once.
    l = pl.program_id(0)
    num_layers = pl.num_programs(0)
    B, S, H = x_ref.shape
    nh = num_heads
    hd = H // nh
    R = B * S
    Lv = vid_len
    scale = 1.0 / (float(hd) ** 0.5)

    # Learned LxL video-attention block (tiny; recomputed per layer so outputs are only
    # written on the first / last grid step -- the safe accumulator pattern).
    learn = jax.nn.sigmoid(watt_ref[...])                               # (L, L)
    row = jax.lax.broadcasted_iota(jnp.int32, (Lv, Lv), 0)
    col = jax.lax.broadcasted_iota(jnp.int32, (Lv, Lv), 1)
    diag = (row == col).astype(jnp.float32)
    video_attention = (1.0 - diag) * learn
    learn_att = diag + video_attention

    @pl.when(l == 0)
    def _():
        # residual stream, flattened so every matmul sees B*S rows
        h_ref[...] = x_ref[...].reshape(R, H).astype(jnp.float32)
        # fused: attention_mask[:, -L:, -L:] = learn_att ; bias = (1 - mask) * -10000
        bias_ref[...] = (1.0 - mask_ref[...]) * (-10000.0)
        bias_ref[:, pl.ds(S - Lv, Lv), pl.ds(S - Lv, Lv)] = jnp.broadcast_to(
            (1.0 - learn_att) * (-10000.0), (B, Lv, Lv))

    small = small_ref[0]          # (9, H): bq, bk, bv, bo, b2, ln1_g, ln1_b, ln2_g, ln2_b
    x_f32 = h_ref[...]            # (R, H) f32 residual stream
    x_bf = x_f32.astype(jnp.bfloat16)

    # ---- fused QKV projection: one (R, H) @ (H, 3H) matmul -------------------------------
    qkv = jnp.dot(x_bf, wqkv_ref[0], preferred_element_type=jnp.float32)   # (R, 3H) f32
    q = qkv[:, :H] + small[0]
    k = qkv[:, H:2 * H] + small[1]
    v = qkv[:, 2 * H:] + small[2]

    # ---- multi-head self-attention (per-batch einsum, heads batched in one contraction) --
    ctx_parts = []
    for b in range(B):            # static unroll; B is small and fixed
        qb = q[b * S:(b + 1) * S].reshape(S, nh, hd).astype(jnp.bfloat16)
        kb = k[b * S:(b + 1) * S].reshape(S, nh, hd).astype(jnp.bfloat16)
        vb = v[b * S:(b + 1) * S].reshape(S, nh, hd).astype(jnp.bfloat16)
        sb = jnp.einsum('qhd,khd->hqk', qb, kb,
                        preferred_element_type=jnp.float32) * scale        # (nh, S, S)
        sb = sb + bias_ref[b][None]
        sb = sb - jnp.max(sb, axis=-1, keepdims=True)
        pb = jnp.exp(sb)
        pb = pb * pl.reciprocal(jnp.sum(pb, axis=-1, keepdims=True), approx=True)
        cb = jnp.einsum('hqk,khd->hqd', pb.astype(jnp.bfloat16), vb,
                        preferred_element_type=jnp.float32)                # (nh, S, hd)
        ctx_parts.append(jnp.swapaxes(cb, 0, 1).reshape(S, H))             # concat-head layout
    ctx = ctx_parts[0] if B == 1 else jnp.concatenate(ctx_parts, axis=0)   # (R, H)

    # ---- single concat-head output projection: (R, H) @ (H, H) ---------------------------
    attn = jnp.dot(ctx.astype(jnp.bfloat16), wo_ref[0],
                   preferred_element_type=jnp.float32) + small[3]
    h1 = _layernorm(x_f32 + attn, small[5], small[6])

    # ---- FFN ------------------------------------------------------------------------------
    f = jnp.dot(h1.astype(jnp.bfloat16), w1_ref[0],
                preferred_element_type=jnp.float32) + b1_ref[0, 0]
    # TODO(synk): PyTorch BERT uses exact erf-GELU; tanh approximation kept for TPU lowering.
    f = jax.nn.gelu(f, approximate=True)
    f = jnp.dot(f.astype(jnp.bfloat16), w2_ref[0],
                preferred_element_type=jnp.float32) + small[4]
    out = _layernorm(h1 + f, small[7], small[8])
    h_ref[...] = out

    @pl.when(l == num_layers - 1)
    def _():
        o_ref[...] = out.reshape(B, S, H).astype(o_ref.dtype)
        part = jnp.sum(jnp.abs(video_attention), axis=1, keepdims=True)    # (L, 1)
        sp_ref[...] = jnp.sum(part, axis=0, keepdims=True) / float(Lv * Lv)


def _encoder_vmem_limit(B, S, H, F, nh):
    # double-buffered per-layer bf16 weights + f32 packed small params
    wbytes = 2 * (2 * (3 * H * H + H * H + H * F + F * H) + 4 * (9 * H + F))
    # resident blocks: x/out (bf16), mask input + bias scratch (f32), residual scratch (f32)
    abytes = B * S * H * (2 + 2 + 4) + B * S * S * 8
    # rough upper bound on per-layer temporaries (scores/probs/ctx/ffn activations)
    tbytes = 4 * B * nh * S * S * 4 + 6 * B * S * max(H, F) * 4
    req = wbytes + abytes + tbytes
    return int(min(56 * 1024 * 1024, max(32 * 1024 * 1024, 2 * req)))


def pallas_encoder_stack(x, attention_mask, learn_att_logits, layers, *, num_heads, vid_len):
    """Run all transformer layers in one pallas_call. grid=(num_layers,)."""
    B, S, H = x.shape
    NL = layers["wqkv"].shape[0]
    F = layers["w1"].shape[2]
    L = vid_len

    kernel = functools.partial(_encoder_stack_kernel, num_heads=num_heads, vid_len=vid_len)

    def wspec(shape):   # per-layer tensor stacked on a leading layer axis
        nd = len(shape)
        return pl.BlockSpec((1,) + shape, lambda l, _nd=nd: (l,) + (0,) * _nd)

    in_specs = [
        pl.BlockSpec((B, S, H), lambda l: (0, 0, 0)),   # x (bf16), fetched once
        pl.BlockSpec((B, S, S), lambda l: (0, 0, 0)),   # raw attention mask (f32), fetched once
        pl.BlockSpec((L, L), lambda l: (0, 0)),         # learn_vid_att logits
        wspec((H, 3 * H)),                              # fused QKV weight
        wspec((H, H)),                                  # concat-head output projection
        wspec((H, F)),                                  # FFN in
        wspec((F, H)),                                  # FFN out
        wspec((9, H)),                                  # packed biases + LayerNorm params
        wspec((1, F)),                                  # FFN-in bias (F-wide)
    ]
    out_specs = (
        pl.BlockSpec((B, S, H), lambda l: (0, 0, 0)),
        pl.BlockSpec((1, 1), lambda l: (0, 0)),
    )
    return pl.pallas_call(
        kernel,
        out_shape=(jax.ShapeDtypeStruct((B, S, H), jnp.bfloat16),
                   jax.ShapeDtypeStruct((1, 1), jnp.float32)),
        grid_spec=pltpu.PrefetchScalarGridSpec(
            num_scalar_prefetch=0,
            grid=(NL,),
            in_specs=in_specs,
            out_specs=out_specs,
            scratch_shapes=[pltpu.VMEM((B * S, H), jnp.float32),   # residual stream
                            pltpu.VMEM((B, S, S), jnp.float32)],   # additive attention bias
        ),
        compiler_params=pltpu.CompilerParams(
            dimension_semantics=("arbitrary",),
            vmem_limit_bytes=_encoder_vmem_limit(B, S, H, F, num_heads)),
    )(x, attention_mask, learn_att_logits,
      layers["wqkv"], layers["wo"], layers["w1"], layers["w2"],
      layers["small"], layers["b1"])


# --------------------------------------------------------------------------
# Parameters (deterministic, synthetic)
# --------------------------------------------------------------------------

def init_params(key, *, vocab_size, max_pos, hidden, ffn, num_layers,
                img_feat_dim, frame_dim, max_num_frames, num_heads):
    del num_heads  # head count only matters at run time (concat-head weight layout)
    keys = iter(jax.random.split(key, 16))

    def dense(shape, dtype=jnp.bfloat16):
        return (jax.random.normal(next(keys), shape, jnp.float32) * 0.02).astype(dtype)

    # packed small params: rows = [bq, bk, bv, bo, b2, ln1_g, ln1_b, ln2_g, ln2_b]
    small = jnp.zeros((num_layers, 9, hidden), jnp.float32)
    small = small.at[:, 5, :].set(1.0).at[:, 7, :].set(1.0)

    params = {
        "extracter_w": dense((frame_dim, img_feat_dim)),
        "extracter_b": jnp.zeros((img_feat_dim,), jnp.float32),
        "img_emb_w": dense((img_feat_dim, hidden)),
        "img_emb_b": jnp.zeros((hidden,), jnp.float32),
        "word_emb": dense((vocab_size, hidden), jnp.float32),
        "pos_emb": dense((max_pos, hidden), jnp.float32),
        # torch.nn.Embedding(L*L, 1) -> weight (L*L, 1)
        "learn_vid_att": jax.random.normal(next(keys),
                                           (max_num_frames * max_num_frames, 1), jnp.float32),
        "layers": {
            "wqkv": dense((num_layers, hidden, 3 * hidden)),   # fused QKV
            "wo": dense((num_layers, hidden, hidden)),         # concat-head layout
            "w1": dense((num_layers, hidden, ffn)),
            "w2": dense((num_layers, ffn, hidden)),
            "small": small,
            "b1": jnp.zeros((num_layers, 1, ffn), jnp.float32),
        },
    }
    return params


# --------------------------------------------------------------------------
# VideoTransformer.forward
# --------------------------------------------------------------------------

def video_transformer_forward(params, input_ids, attention_mask, img_feats, img_feats_f,
                              *, num_heads, max_num_frames, compute_feats_f=False):
    B, L, C, Hh, Ww = img_feats.shape
    P = C * Hh * Ww

    # Extracter stand-in: flatten each NCHW frame and linearly project to img_feature_dim.
    # TODO(synk): the real Extracter is a CLIP visual backbone (unavailable); replaced with a
    #             deterministic per-frame linear projection in a Pallas matmul kernel.
    vid_feats = pallas_linear(img_feats.reshape(B, L, P),
                              params["extracter_w"], params["extracter_b"])
    if compute_feats_f:
        # TODO(synk): img_feats_f feeds a contrastive head inside BertForImageCaptioning that is
        #             not reproduced; gated off by default to avoid dead compute/DMA.
        _ = pallas_linear(img_feats_f.reshape(B, L, P),
                          params["extracter_w"], params["extracter_b"])

    # Minimal BERT embedding (trans_encoder stand-in). Embedding gather stays in XLA.
    T = input_ids.shape[1]
    assert T <= params["pos_emb"].shape[0], "input longer than position table"
    text_emb = params["word_emb"][input_ids] + params["pos_emb"][:T][None]          # (B, T, H)
    img_emb = pallas_linear(vid_feats, params["img_emb_w"], params["img_emb_b"])    # (B, L, H)
    x = jnp.concatenate([text_emb.astype(jnp.bfloat16), img_emb], axis=1)           # (B, T+L, H)

    # learn_mask_enabled path: the learned-mask overwrite, additive-bias construction,
    # sparsity loss and the full encoder stack are fused into ONE pallas_call.
    seq_out, sparsity = pallas_encoder_stack(
        x, attention_mask.astype(jnp.float32),
        params["learn_vid_att"].reshape(max_num_frames, max_num_frames),
        params["layers"], num_heads=num_heads, vid_len=max_num_frames)

    # outputs = trans_encoder_outputs + (loss_sparsity,)
    return (seq_out, sparsity[0, 0])


# --------------------------------------------------------------------------

if __name__ == "__main__":
    B = 2                 # batch
    T = 8                 # text tokens
    L = 8                 # max_num_frames == max_img_seq_length
    C, Hh, Ww = 3, 8, 8   # NCHW per frame
    hidden = 128          # lane-dense hidden (multiple of 128)
    num_heads = 2         # head_dim = 64 (kept >= 64 per review)
    ffn = 256
    img_feat_dim = 128
    vocab = 50
    num_layers = 2
    S = T + L

    key = jax.random.PRNGKey(0)
    kp, k1, k2, k3 = jax.random.split(key, 4)
    params = init_params(kp, vocab_size=vocab, max_pos=32, hidden=hidden, ffn=ffn,
                         num_layers=num_layers, img_feat_dim=img_feat_dim,
                         frame_dim=C * Hh * Ww, max_num_frames=L, num_heads=num_heads)

    img_feats = jax.random.normal(k1, (B, L, C, Hh, Ww), jnp.float32)
    img_feats_f = jax.random.normal(k2, (B, L, C, Hh, Ww), jnp.float32)
    input_ids = jax.random.randint(k3, (B, T), 0, vocab)
    attention_mask = jnp.ones((B, S, S), jnp.float32)

    seq_out, loss_sparsity = video_transformer_forward(
        params, input_ids, attention_mask, img_feats, img_feats_f,
        num_heads=num_heads, max_num_frames=L)

    jax.block_until_ready((seq_out, loss_sparsity))
    assert seq_out.shape == (B, S, hidden)
    assert loss_sparsity.shape == ()
    print("KERNEL_OK")
</pallas_src>

<mosaic_0001>
module attributes {stable_mosaic.version = 11 : i64} {
  func.func @_linear_kernel(%arg0: i32, %arg1: i32, %arg2: memref<16x192xf32, #tpu.memory_space<vmem>>, %arg3: memref<192x128xbf16, #tpu.memory_space<vmem>>, %arg4: memref<1x128xf32, #tpu.memory_space<vmem>>, %arg5: memref<16x128xbf16, #tpu.memory_space<vmem>>, %arg6: memref<16x128xf32, #tpu.memory_space<vmem>>) attributes {dimension_semantics = [#tpu.dimension_semantics<parallel>, #tpu.dimension_semantics<arbitrary>], iteration_bounds = array<i64: 1, 1>, scalar_prefetch = 0 : i64, scratch_operands = 1 : i64, tpu.core_type = #tpu.core_type<tc>, window_params = [{transform_indices = @transform_0, window_bounds = array<i64: 16, 192>}, {transform_indices = @transform_1, window_bounds = array<i64: 192, 128>}, {pipeline_mode = #tpu.pipeline_mode<synchronous>, transform_indices = @transform_2, window_bounds = array<i64: 1, 128>}, {transform_indices = @transform_3, window_bounds = array<i64: 16, 128>}]} {
    %c0_i32 = arith.constant 0 : i32
    %0 = arith.cmpi eq, %arg1, %c0_i32 : i32
    %1 = arith.extui %0 : i1 to i32
    %c0_i32_0 = arith.constant 0 : i32
    %2 = arith.cmpi ne, %1, %c0_i32_0 : i32
    scf.if %2 {
      %cst_10 = arith.constant 0.000000e+00 : f32
      %13 = vector.broadcast %cst_10 : f32 to vector<16x128xf32>
      %c0_11 = arith.constant 0 : index
      %c0_12 = arith.constant 0 : index
      %14 = vector.load %arg6[%c0_11, %c0_12] : memref<16x128xf32, #tpu.memory_space<vmem>>, vector<16x128xf32>
      tpu.vector_store %arg6[%c0_11, %c0_12], %13 {strides = array<i32>} : memref<16x128xf32, #tpu.memory_space<vmem>>, vector<16x128xf32>,
    } else {
    }
    %c0 = arith.constant 0 : index
    %c0_1 = arith.constant 0 : index
    %3 = vector.load %arg6[%c0, %c0_1] : memref<16x128xf32, #tpu.memory_space<vmem>>, vector<16x128xf32>
    %c0_2 = arith.constant 0 : index
    %c0_3 = arith.constant 0 : index
    %4 = vector.load %arg2[%c0_2, %c0_3] : memref<16x192xf32, #tpu.memory_space<vmem>>, vector<16x192xf32>
    %5 = arith.truncf %4 : vector<16x192xf32> to vector<16x192xbf16>
    %c0_4 = arith.constant 0 : index
    %c0_5 = arith.constant 0 : index
    %6 = vector.load %arg3[%c0_4, %c0_5] : memref<192x128xbf16, #tpu.memory_space<vmem>>, vector<192x128xbf16>
    %cst = arith.constant dense<0.000000e+00> : vector<16x128xf32>
    %7 = tpu.matmul %5, %6, %cst {dimension_numbers = #tpu.dot_dimension_numbers<[1], [0], [0], [1], [0, 0, 1, 1], [], []>} : vector<16x192xbf16>, vector<192x128xbf16>, vector<16x128xf32> -> vector<16x128xf32>
    %8 = arith.addf %3, %7 : vector<16x128xf32>
    %c0_6 = arith.constant 0 : index
    %c0_7 = arith.constant 0 : index
    %9 = vector.load %arg6[%c0_6, %c0_7] : memref<16x128xf32, #tpu.memory_space<vmem>>, vector<16x128xf32>
    tpu.vector_store %arg6[%c0_6, %c0_7], %8 {strides = array<i32>} : memref<16x128xf32, #tpu.memory_space<vmem>>, vector<16x128xf32>,
    %c0_i32_8 = arith.constant 0 : i32
    %10 = arith.cmpi eq, %arg1, %c0_i32_8 : i32
    %11 = arith.extui %10 : i1 to i32
    %c0_i32_9 = arith.constant 0 : i32
    %12 = arith.cmpi ne, %11, %c0_i32_9 : i32
    scf.if %12 {
      %c0_10 = arith.constant 0 : index
      %c0_11 = arith.constant 0 : index
      %13 = vector.load %arg6[%c0_10, %c0_11] : memref<16x128xf32, #tpu.memory_space<vmem>>, vector<16x128xf32>
      %c0_12 = arith.constant 0 : index
      %c0_13 = arith.constant 0 : index
      %14 = vector.load %arg4[%c0_12, %c0_13] : memref<1x128xf32, #tpu.memory_space<vmem>>, vector<1x128xf32>
      %15 = vector.broadcast %14 : vector<1x128xf32> to vector<16x128xf32>
      %16 = arith.addf %13, %15 : vector<16x128xf32>
      %17 = arith.truncf %16 : vector<16x128xf32> to vector<16x128xbf16>
      %c0_14 = arith.constant 0 : index
      %c0_15 = arith.constant 0 : index
      %18 = vector.load %arg5[%c0_14, %c0_15] : memref<16x128xbf16, #tpu.memory_space<vmem>>, vector<16x128xbf16>
      tpu.vector_store %arg5[%c0_14, %c0_15], %17 {strides = array<i32>} : memref<16x128xbf16, #tpu.memory_space<vmem>>, vector<16x128xbf16>,
    } else {
    }
    return
  }
  func.func @transform_0(%arg0: i32, %arg1: i32) -> (i32, i32) {
    %c0_i32 = arith.constant 0 : i32
    return %arg0, %arg1 : i32, i32
  }
  func.func @transform_1(%arg0: i32, %arg1: i32) -> (i32, i32) {
    %c0_i32 = arith.constant 0 : i32
    %c0_i32_0 = arith.constant 0 : i32
    return %arg1, %c0_i32 : i32, i32
  }
  func.func @transform_2(%arg0: i32, %arg1: i32) -> (i32, i32) {
    %c0_i32 = arith.constant 0 : i32
    %c0_i32_0 = arith.constant 0 : i32
    %c0_i32_1 = arith.constant 0 : i32
    return %c0_i32, %c0_i32_0 : i32, i32
  }
  func.func @transform_3(%arg0: i32, %arg1: i32) -> (i32, i32) {
    %c0_i32 = arith.constant 0 : i32
    %c0_i32_0 = arith.constant 0 : i32
    return %arg0, %c0_i32 : i32, i32
  }
}

</mosaic_0001>

<llo_original>
// kernel: tpu_custom_call.1
$region0: #{tpu_custom_call.1}
  #allocation0 [shape = 'u32[]', space=smem, size = 0x4, offset = 0x4, fixed_abs, tag = 'smem constant byte address 0x4 - core index']
  #allocation1 [shape = 'u32[144,128]{1,0:T(1,128)}', space=vmem, size = 0x12000, scoped, tag = 'internal scratch']
  #allocation2 [shape = 'f32[16,128]{1,0:T(8,128)}', space=vmem, size = 0x2000, scoped, tag = 'scratch operand']
  %s0 = inlined_call_operand.hbm [shape: f32[16,192], index: 0, kind: input, shape index: {}]
  %s1 = inlined_call_operand.hbm [shape: bf16[192,128], index: 1, kind: input, shape index: {}]
  %s2 = inlined_call_operand.vmem [shape: f32[1,128], index: 2, kind: input, shape index: {}]
  %s3 = inlined_call_operand.hbm [shape: bf16[16,128], index: 3, kind: output, shape index: {}]
  %s4 = sld [smem:[#allocation0]]
  $region38: #{tpu_custom_call.1} parent=0
    _
  %s6 = ssub.s32 1, %s4
  %s7 = scalar_select 0, %s6, %s4
  $region1: #{tpu_custom_call.1} parent=0
    #allocation3 [shape = 'u8[16384]{0}', space=vmem, size = 0x4000, scoped, tag = 'input window, operand 0, single buffered']
    #allocation4 [shape = 's32[1]{0}', space=sflag, size = 0x4, scoped, tag = 'scoped memory for tpu_custom_call.1']
    #allocation5 [shape = 's32[1]{0}', space=sflag, size = 0x4, scoped, tag = 'scoped memory for tpu_custom_call.1']
    #allocation6 [shape = 'u8[49152]{0}', space=vmem, size = 0xc000, scoped, tag = 'input window, operand 1, single buffered']
    #allocation7 [shape = 's32[1]{0}', space=sflag, size = 0x4, scoped, tag = 'scoped memory for tpu_custom_call.1']
    #allocation8 [shape = 'u8[4096]{0}', space=vmem, size = 0x1000, scoped, tag = 'output window, operand 0, single buffered']
    %8 = vsyncpa [#allocation4], 0
    %9 = vsyncpa [#allocation7], 0
    %10 = vsyncpa [#allocation5], 0
    // Predicated region
    $region2: #{tpu_custom_call.1} parent=1 // pred_check
      _
    $region3: #{tpu_custom_call.1} parent=1 // pred_check_branch
      %12 = sbr.rel (0) target = $region5
    $region4: #{tpu_custom_call.1} parent=1 // pred_region
      %s14 = ssub.s32 512, 512
      %15 = vsyncadd [#allocation4], %s14
      %s16 = sshll.u32 [#allocation3], 4
      %s17 = int_to_ptr.vmem [resolvable:$true] %s16
      %22 = dma.hbm_to_vmem [thread:$0]  %s0, 512, %s17, [#allocation4], 256, 256, 16
    $region5: #{tpu_custom_call.1} parent=1 // pred_fallthru
      _
    // Predicated region
    $region6: #{tpu_custom_call.1} parent=1 // pred_check
      _
    $region7: #{tpu_custom_call.1} parent=1 // pred_check_branch
      %24 = sbr.rel (0) target = $region9
    $region8: #{tpu_custom_call.1} parent=1 // pred_region
      %s26 = ssub.s32 1536, 1536
      %27 = vsyncadd [#allocation7], %s26
      %s28 = sshll.u32 [#allocation6], 4
      %s29 = int_to_ptr.vmem [resolvable:$true] %s28
      %34 = dma.hbm_to_vmem [thread:$0]  %s1, 1536, %s29, [#allocation7], 64, 64, 4
    $region9: #{tpu_custom_call.1} parent=1 // pred_fallthru
      _
    // Predicated region
    $region10: #{tpu_custom_call.1} parent=1 // pred_check
      _
    $region11: #{tpu_custom_call.1} parent=1 // pred_check_branch
      %36 = sbr.rel (0) target = $region13
    $region12: #{tpu_custom_call.1} parent=1 // pred_region
      _
    $region13: #{tpu_custom_call.1} parent=1 // pred_fallthru
      _
    // Predicated region
    $region14: #{tpu_custom_call.1} parent=1 // pred_check
      _
    $region15: #{tpu_custom_call.1} parent=1 // pred_check_branch
      %38 = sbr.rel (0) target = $region17
    $region16: #{tpu_custom_call.1} parent=1 // pred_region
      %39 = dma.done [#allocation4], 512
    $region17: #{tpu_custom_call.1} parent=1 // pred_fallthru
      _
    // Predicated region
    $region18: #{tpu_custom_call.1} parent=1 // pred_check
      _
    $region19: #{tpu_custom_call.1} parent=1 // pred_check_branch
      %41 = sbr.rel (0) target = $region21
    $region20: #{tpu_custom_call.1} parent=1 // pred_region
      %42 = dma.done [#allocation7], 1536
    $region21: #{tpu_custom_call.1} parent=1 // pred_fallthru
      _
    %p44 = scmp.eq.s32.totalorder 0, 0
    // Predicated region
    $region22: #{tpu_custom_call.1} parent=1 // pred_check
      %p45 = pneg %p44
    $region23: #{tpu_custom_call.1} parent=1 // pred_check_branch
      %47 = sbr.rel (%p45) target = $region25
    $region24: #{tpu_custom_call.1} parent=1 // pred_region
      %48 = vst [vmem:[#allocation2] sm:$0xff] 0.0
      %49 = vst [vmem:[#allocation2 + $0x8] sm:$0xff] 0.0
    $region25: #{tpu_custom_call.1} parent=1 // pred_fallthru
      _
    %v50 = vld [vmem:[#allocation2] sm:$0xff]
    %v51 = vld [vmem:[#allocation2 + $0x8] sm:$0xff]
    %v52 = vld [vmem:[#allocation3] sm:$0xff]
    %v53 = vld [vmem:[#allocation3 + $0x8] sm:$0xff]
    %v54 = vld [vmem:[#allocation3 + $0x10] sm:$0xff]
    %v55 = vld [vmem:[#allocation3 + $0x18] sm:$0xff]
    %v56 = vpack.c.bf16 %v54, %v52
    %v57 = vpack.c.bf16 %v55, %v53
    %v58 = vld [vmem:[#allocation6] sm:$0xf]
    %v59 = vld [vmem:[#allocation6 + $0x4] sm:$0xf]
    %v60 = vld [vmem:[#allocation6 + $0x8] sm:$0xf]
    %v61 = vld [vmem:[#allocation6 + $0xc] sm:$0xf]
    %v62 = vld [vmem:[#allocation6 + $0x10] sm:$0xf]
    %v63 = vld [vmem:[#allocation6 + $0x14] sm:$0xf]
    %v64 = vld [vmem:[#allocation6 + $0x18] sm:$0xf]
    %v65 = vld [vmem:[#allocation6 + $0x1c] sm:$0xf]
    %v66 = vld [vmem:[#allocation6 + $0x20] sm:$0xf]
    %v67 = vld [vmem:[#allocation6 + $0x24] sm:$0xf]
    %v68 = vld [vmem:[#allocation6 + $0x28] sm:$0xf]
    %v69 = vld [vmem:[#allocation6 + $0x2c] sm:$0xf]
    %v70 = vld [vmem:[#allocation6 + $0x30] sm:$0xf]
    %v71 = vld [vmem:[#allocation6 + $0x34] sm:$0xf]
    %v72 = vld [vmem:[#allocation6 + $0x38] sm:$0xf]
    %v73 = vld [vmem:[#allocation6 + $0x3c] sm:$0xf]
    %v74 = vld [vmem:[#allocation6 + $0x40] sm:$0xf]
    %v75 = vld [vmem:[#allocation6 + $0x44] sm:$0xf]
    %v76 = vld [vmem:[#allocation6 + $0x48] sm:$0xf]
    %v77 = vld [vmem:[#allocation6 + $0x4c] sm:$0xf]
    %v78 = vld [vmem:[#allocation6 + $0x50] sm:$0xf]
    %v79 = vld [vmem:[#allocation6 + $0x54] sm:$0xf]
    %v80 = vld [vmem:[#allocation6 + $0x58] sm:$0xf]
    %v81 = vld [vmem:[#allocation6 + $0x5c] sm:$0xf]
    %v106 = vunpack.c.l.b16 %v58
    %v107 = vunpack.c.l.b16 %v59
    %v108 = vunpack.c.l.b16 %v60
    %v109 = vunpack.c.l.b16 %v61
    %v110 = vunpack.c.l.b16 %v62
    %v111 = vunpack.c.l.b16 %v63
    %v112 = vunpack.c.l.b16 %v64
    %v113 = vunpack.c.l.b16 %v65
    %v114 = vunpack.c.l.b16 %v66
    %v115 = vunpack.c.l.b16 %v67
    %v116 = vunpack.c.l.b16 %v68
    %v117 = vunpack.c.l.b16 %v69
    %v118 = vunpack.c.l.b16 %v70
    %v119 = vunpack.c.l.b16 %v71
    %v120 = vunpack.c.l.b16 %v72
    %v121 = vunpack.c.l.b16 %v73
    %v122 = vunpack.c.l.b16 %v74
    %v123 = vunpack.c.l.b16 %v75
    %v124 = vunpack.c.l.b16 %v76
    %v125 = vunpack.c.l.b16 %v77
    %v126 = vunpack.c.l.b16 %v78
    %v127 = vunpack.c.l.b16 %v79
    %v128 = vunpack.c.l.b16 %v80
    %v129 = vunpack.c.l.b16 %v81
    %v130 = vpack.c.b16 %v107, %v106
    %v131 = vpack.c.b16 %v109, %v108
    %v132 = vpack.c.b16 %v111, %v110
    %v133 = vpack.c.b16 %v113, %v112
    %v134 = vpack.c.b16 %v115, %v114
    %v135 = vpack.c.b16 %v117, %v116
    %v136 = vpack.c.b16 %v119, %v118
    %v137 = vpack.c.b16 %v121, %v120
    %v138 = vpack.c.b16 %v123, %v122
    %v139 = vpack.c.b16 %v125, %v124
    %v140 = vpack.c.b16 %v127, %v126
    %v141 = vpack.c.b16 %v129, %v128
    %vm154 = vcmask 523264
    %v156 = vsel %vm154, %v57, 0
    %158 = vmatprep.subr.bf16.mxu0 0
    %159 = vmatpush1.bf16.msra.mxu0 %v130
    %160 = vmatprep.subr.bf16.mxu0 0
    %161 = vmatpush1.bf16.msra.mxu0 %v131
    %162 = vmatprep.subr.bf16.mxu0 0
    %163 = vmatpush1.bf16.msra.mxu0 %v132
    %164 = vmatprep.subr.bf16.mxu0 0
    %165 = vmatpush1.bf16.msra.mxu0 %v133
    %166 = vmatprep.subr.bf16.mxu0 0
    %167 = vmatpush1.bf16.msra.mxu0 %v134
    %168 = vmatprep.subr.bf16.mxu0 0
    %169 = vmatpush1.bf16.msra.mxu0 %v135
    %170 = vmatprep.subr.bf16.mxu0 0
    %171 = vmatpush1.bf16.msra.mxu0 %v136
    %172 = vmatprep.subr.bf16.mxu0 0
    %173 = vmatpush1.bf16.msra.mxu0 %v137
    %174 = vmatprep.subr.bf16.mxu0 0
    %175 = vmatpush1.bf16.msra.mxu0 %v138
    %176 = vmatprep.subr.bf16.mxu0 0
    %177 = vmatpush1.bf16.msra.mxu0 %v139
    %178 = vmatprep.subr.bf16.mxu0 0
    %179 = vmatpush1.bf16.msra.mxu0 %v140
    %180 = vmatprep.subr.bf16.mxu0 0
    %181 = vmatpush1.bf16.msra.mxu0 %v141
    %182 = vmatprep.subr.bf16.mxu0 0
    %183 = vmatpush1.bf16.msra.mxu0 0
    %184 = vmatprep.subr.bf16.mxu0 0
    %185 = vmatpush1.bf16.msra.mxu0 0
    %186 = vmatprep.subr.bf16.mxu0 0
    %187 = vmatpush1.bf16.msra.mxu0 0
    %188 = vmatprep.subr.bf16.mxu0 0
    %189 = vmatpush1.bf16.msra.mxu0 0
    %190 = vmatprep.mubr.bf16.mxu0 %v156
    %191 = vmatmul.mubr.bf16.gmra.mrb[0].mxu0 %v56
    %v192 = vpop.f32.mrb[0].mxu0
    %v193 = vadd.f32 0.0, %v192
    %v194 = vpop.f32.mrb[0].mxu0
    %v195 = vpop.f32.mrb[0].mxu0
    %v196 = vadd.f32 0.0, %v195
    %v197 = vpop.f32.mrb[0].mxu0
    %198 = vdwg.mxu0
    %v199 = vadd.f32 %v50, %v193
    %v200 = vadd.f32 %v51, %v196
    %201 = vst [vmem:[#allocation2] sm:$0xff] %v199
    %202 = vst [vmem:[#allocation2 + $0x8] sm:$0xff] %v200
    // Predicated region
    $region26: #{tpu_custom_call.1} parent=1 // pred_check
      %p203 = pneg %p44
    $region27: #{tpu_custom_call.1} parent=1 // pred_check_branch
      %205 = sbr.rel (%p203) target = $region29
    $region28: #{tpu_custom_call.1} parent=1 // pred_region
      %v206 = vld [vmem:[#allocation2] sm:$0xff]
      %v207 = vld [vmem:[#allocation2 + $0x8] sm:$0xff]
      %v208 = vld [vmem:[%s2] sm:$0x1]
      %v210 = vlaneseq
      %v211 = vshrl.u32 %v210, 7
      %v212 = vsub.s32 0, %v211
      %v213 = vrot.slane %v208, %v212
      %v215 = vadd.f32 %v206, %v213
      %v216 = vadd.f32 %v207, %v213
      %v217 = vpack.c.bf16 %v216, %v215
      %v219 = vunpack.c.l.b16 %v217
      %v220 = vunpack.c.h.b16 %v217
      %v221 = vpack.c.b16 %v219, %v219
      %v222 = vpack.c.b16 %v220, %v220
      %225 = vst [vmem:[#allocation8] sm:$0xf] %v221
      %226 = vst [vmem:[#allocation8 + $0x4] sm:$0xf] %v222
    $region29: #{tpu_custom_call.1} parent=1 // pred_fallthru
      _
    // Predicated region
    $region30: #{tpu_custom_call.1} parent=1 // pred_check
      _
    $region31: #{tpu_custom_call.1} parent=1 // pred_check_branch
      %228 = sbr.rel (0) target = $region33
    $region32: #{tpu_custom_call.1} parent=1 // pred_region
      %s230 = ssub.s32 128, 128
      %231 = vsyncadd [#allocation5], %s230
      %s232 = sshll.u32 [#allocation8], 4
      %s233 = int_to_ptr.vmem [resolvable:$true] %s232
      %238 = dma.vmem_to_hbm [thread:$0]  %s233, 128, %s3, [#allocation5], 64, 64, 4
    $region33: #{tpu_custom_call.1} parent=1 // pred_fallthru
      _
    // Predicated region
    $region34: #{tpu_custom_call.1} parent=1 // pred_check
      _
    $region35: #{tpu_custom_call.1} parent=1 // pred_check_branch
      %240 = sbr.rel (0) target = $region37
    $region36: #{tpu_custom_call.1} parent=1 // pred_region
      %241 = dma.done [#allocation5], 128
    $region37: #{tpu_custom_call.1} parent=1 // pred_fallthru
      _
    %242 = vsyncpa [#allocation4], 1
    %243 = vsyncpa [#allocation7], 1
    %244 = vsyncpa [#allocation5], 1

</llo_original>
